<compile_context>
chip_gen: v7x
topology: tpu7x:2x2x1
jax: 0.10.0
libtpu: 0.0.40
codegen_flags: <defaults>
</compile_context>

<pallas_src>
import functools
import math

import jax
import jax.numpy as jnp
from jax import lax
from jax.experimental import pallas as pl
from jax.experimental.pallas import tpu as pltpu

_LANE = 128
_SUBLANE = 8
_NEG_BIG = -1e30


def _round_up(n, m):
    return ((n + m - 1) // m) * m


# ----------------------------------------------------------------------------
# Pallas kernel: fused 3-layer MLP with gelu / sigmoid / softmax activations.
# Hidden feature dims are zero-padded to 128 lanes (done once at init time);
# the output is stored at its true width.
# ----------------------------------------------------------------------------
def _decoder_kernel(x_ref, w1_ref, b1_ref, w2_ref, b2_ref, w3_ref, b3_ref,
                    o_ref, *, use_tanh_gelu):
    x = x_ref[...]  # f32 tile [tb, d_in]

    # --- layer 0: Linear + GELU ---
    h = jnp.dot(x, w1_ref[...], preferred_element_type=jnp.float32) + b1_ref[...]
    if use_tanh_gelu:
        # tanh-approx GELU runs on the (otherwise idle) EUP; slight numerics
        # change vs nn.GELU()'s exact erf, hence gated behind a flag.
        c = jnp.float32(math.sqrt(2.0 / math.pi))
        h = 0.5 * h * (1.0 + jnp.tanh(c * (h + 0.044715 * h * h * h)))
    else:
        # exact erf form matches nn.GELU() default semantics.
        h = 0.5 * h * (1.0 + lax.erf(h * jnp.float32(1.0 / math.sqrt(2.0))))
    # Padded hidden lanes: gelu(0) == 0 and the matching rows of w2 are zero,
    # so they contribute nothing downstream.
    # TODO(synk): nn.Dropout(p=0.5) after layer 0 is identity in eval/inference
    # mode; training-mode stochastic dropout (pltpu.prng_*) intentionally omitted.

    # --- layer 1: Linear + Sigmoid (single EUP logistic) ---
    h = jnp.dot(h, w2_ref[...], preferred_element_type=jnp.float32) + b2_ref[...]
    h = jax.nn.sigmoid(h)
    # Padded lanes become sigmoid(0)=0.5 but the matching rows of w3 are zero.

    # --- layer 2: Linear + Softmax(dim=-1) ---
    # Padded logit lanes carry bias -1e30 (baked into b3), so no explicit mask
    # is needed: exp() drives them to exactly 0 and the row sum is unaffected.
    h = jnp.dot(h, w3_ref[...], preferred_element_type=jnp.float32) + b3_ref[...]
    m = jnp.max(h, axis=-1, keepdims=True)
    e = jnp.exp(h - m)
    s = jnp.sum(e, axis=-1, keepdims=True)
    p = e / s  # exact reciprocal: softmax rows sum to ~1 (no approx-rcp error)
    # Store only the true-width columns; o_ref is [tb, d_out].
    o_ref[...] = p[:, : o_ref.shape[-1]].astype(o_ref.dtype)


# ----------------------------------------------------------------------------
# One-time parameter preparation (OFF the per-call path).
# ----------------------------------------------------------------------------
def prepare_params(params):
    """Transpose weights to [in, out] and pad hidden/output dims to 128 lanes.

    The padded lanes of b3 are filled with -1e30 so the padded logits are
    masked "for free" inside the kernel's softmax.
    """
    (w1, b1), (w2, b2), (w3, b3) = params
    d_in = w1.shape[1]
    d1, d2, d3 = w1.shape[0], w2.shape[0], w3.shape[0]
    p1, p2, p3 = _round_up(d1, _LANE), _round_up(d2, _LANE), _round_up(d3, _LANE)

    def pad_wt(w, in_pad, out_pad):
        wt = jnp.asarray(w, jnp.float32).T  # [in, out]
        return jnp.pad(wt, ((0, in_pad - wt.shape[0]), (0, out_pad - wt.shape[1])))

    def pad_b(b, out_pad, pad_value=0.0):
        b = jnp.asarray(b, jnp.float32)
        return jnp.pad(b, (0, out_pad - b.shape[0]),
                       constant_values=pad_value)[None, :]

    return {
        "w1t": pad_wt(w1, d_in, p1), "b1": pad_b(b1, p1),
        "w2t": pad_wt(w2, p1, p2),   "b2": pad_b(b2, p2),
        "w3t": pad_wt(w3, p2, p3),   "b3": pad_b(b3, p3, _NEG_BIG),
        "d_out": d3,
    }


# ----------------------------------------------------------------------------
# Wrapper
# ----------------------------------------------------------------------------
def decoder_forward(x, prepped, tile_b=2048, use_tanh_gelu=False):
    """x: [B, d_in] float32.  prepped: output of prepare_params()."""
    B, d_in = x.shape
    w1t, b1 = prepped["w1t"], prepped["b1"]
    w2t, b2 = prepped["w2t"], prepped["b2"]
    w3t, b3 = prepped["w3t"], prepped["b3"]
    d_out = prepped["d_out"]

    # Tile size: as large as possible (amortizes ~0.35us/step pipeline
    # overhead) but capped so the grid has >= 2 steps when B allows, letting
    # v7x's two TensorCores split the "parallel" batch axis.  At tb=2048 the
    # working set (~4 MiB incl. double-buffered x/out tiles and three
    # [tb,128] f32 intermediates) stays far under v5e's 16 MiB scoped-VMEM
    # default, so no vmem_limit_bytes override is required.
    tb = min(tile_b, _round_up(pl.cdiv(B, 2), _SUBLANE))
    if tb >= B:
        tb = B  # single full-batch step (block dims == array dims -> legal)
    grid = (pl.cdiv(B, tb),)

    def resident(arr):
        # Constant index_map: Pallas does not re-DMA a block whose index is
        # unchanged across grid steps, so weights/biases stay VMEM-resident.
        return pl.BlockSpec(arr.shape, lambda i: (0, 0))

    return pl.pallas_call(
        functools.partial(_decoder_kernel, use_tanh_gelu=use_tanh_gelu),
        out_shape=jax.ShapeDtypeStruct((B, d_out), jnp.float32),
        grid=grid,
        in_specs=[
            pl.BlockSpec((tb, d_in), lambda i: (i, 0)),
            resident(w1t), resident(b1),
            resident(w2t), resident(b2),
            resident(w3t), resident(b3),
        ],
        # True-width output: d_out equals the full array dim, so this is a
        # legal BlockSpec; masked vst.msk stores replace the old padded slab
        # + post-kernel slice (kills the output write amplification).
        out_specs=pl.BlockSpec((tb, d_out), lambda i: (i, 0)),
        compiler_params=pltpu.CompilerParams(
            dimension_semantics=("parallel",)),
    )(x, w1t, b1, w2t, b2, w3t, b3)


# ----------------------------------------------------------------------------
# Init / reference
# ----------------------------------------------------------------------------
def init_params(key, dim_list):
    """Deterministic PyTorch-Linear-style init: U(-1/sqrt(fan_in), +)."""
    params = []
    for i in range(len(dim_list) - 1):
        fan_in, fan_out = dim_list[i], dim_list[i + 1]
        key, kw, kb = jax.random.split(key, 3)
        bound = 1.0 / math.sqrt(fan_in)
        w = jax.random.uniform(kw, (fan_out, fan_in), jnp.float32,
                               minval=-bound, maxval=bound)
        b = jax.random.uniform(kb, (fan_out,), jnp.float32,
                               minval=-bound, maxval=bound)
        params.append((w, b))
    return params


def decoder_reference(x, params):
    """Pure-JAX reference of the PyTorch forward (eval mode)."""
    (w1, b1), (w2, b2), (w3, b3) = params
    h = jax.nn.gelu(x @ w1.T + b1, approximate=False)  # nn.GELU() default (erf)
    # Dropout: identity in eval mode
    h = jax.nn.sigmoid(h @ w2.T + b2)
    h = h @ w3.T + b3
    return jax.nn.softmax(h, axis=-1)


if __name__ == "__main__":
    # Small shapes consistent with the module: dim_list defines the MLP widths.
    dim_list = [32, 64, 48, 16]
    act_list = ["gelu", "sigmoid", "softmax"]
    batch = 8

    key = jax.random.PRNGKey(0)
    key, kx = jax.random.split(key)
    x = jax.random.normal(kx, (batch, dim_list[0]), jnp.float32)
    params = init_params(key, dim_list)
    prepped = prepare_params(params)   # one-time; not on the per-call path

    out = decoder_forward(x, prepped)
    out = jax.block_until_ready(out)

    ref = decoder_reference(x, params)
    assert out.shape == (batch, dim_list[-1])
    # Exact erf GELU, exact logistic, exact softmax reciprocal -> tight tolerance.
    assert jnp.allclose(out, ref, atol=1e-5, rtol=1e-5), "mismatch vs reference"

    print("KERNEL_OK")
</pallas_src>

<mosaic_0001>
module attributes {stable_mosaic.version = 11 : i64} {
  func.func @_decoder_kernel(%arg0: i32, %arg1: memref<8x32xf32, #tpu.memory_space<vmem>>, %arg2: memref<32x128xf32, #tpu.memory_space<vmem>>, %arg3: memref<1x128xf32, #tpu.memory_space<vmem>>, %arg4: memref<128x128xf32, #tpu.memory_space<vmem>>, %arg5: memref<1x128xf32, #tpu.memory_space<vmem>>, %arg6: memref<128x128xf32, #tpu.memory_space<vmem>>, %arg7: memref<1x128xf32, #tpu.memory_space<vmem>>, %arg8: memref<8x16xf32, #tpu.memory_space<vmem>>) attributes {dimension_semantics = [#tpu.dimension_semantics<parallel>], iteration_bounds = array<i64: 1>, scalar_prefetch = 0 : i64, scratch_operands = 0 : i64, tpu.core_type = #tpu.core_type<tc>, window_params = [{transform_indices = @transform_0, window_bounds = array<i64: 8, 32>}, {pipeline_mode = #tpu.pipeline_mode<synchronous>, transform_indices = @transform_1, window_bounds = array<i64: 32, 128>}, {pipeline_mode = #tpu.pipeline_mode<synchronous>, transform_indices = @transform_2, window_bounds = array<i64: 1, 128>}, {pipeline_mode = #tpu.pipeline_mode<synchronous>, transform_indices = @transform_3, window_bounds = array<i64: 128, 128>}, {pipeline_mode = #tpu.pipeline_mode<synchronous>, transform_indices = @transform_4, window_bounds = array<i64: 1, 128>}, {pipeline_mode = #tpu.pipeline_mode<synchronous>, transform_indices = @transform_5, window_bounds = array<i64: 128, 128>}, {pipeline_mode = #tpu.pipeline_mode<synchronous>, transform_indices = @transform_6, window_bounds = array<i64: 1, 128>}, {transform_indices = @transform_7, window_bounds = array<i64: 8, 16>}]} {
    %c0 = arith.constant 0 : index
    %c0_0 = arith.constant 0 : index
    %0 = vector.load %arg1[%c0, %c0_0] : memref<8x32xf32, #tpu.memory_space<vmem>>, vector<8x32xf32>
    %c0_1 = arith.constant 0 : index
    %c0_2 = arith.constant 0 : index
    %1 = vector.load %arg2[%c0_1, %c0_2] : memref<32x128xf32, #tpu.memory_space<vmem>>, vector<32x128xf32>
    %cst = arith.constant dense<0.000000e+00> : vector<8x128xf32>
    %2 = tpu.matmul %0, %1, %cst {dimension_numbers = #tpu.dot_dimension_numbers<[1], [0], [0], [1], [0, 0, 1, 1], [], []>} : vector<8x32xf32>, vector<32x128xf32>, vector<8x128xf32> -> vector<8x128xf32>
    %c0_3 = arith.constant 0 : index
    %c0_4 = arith.constant 0 : index
    %3 = vector.load %arg3[%c0_3, %c0_4] : memref<1x128xf32, #tpu.memory_space<vmem>>, vector<1x128xf32>
    %4 = vector.broadcast %3 : vector<1x128xf32> to vector<8x128xf32>
    %5 = arith.addf %2, %4 : vector<8x128xf32>
    %cst_5 = arith.constant 5.000000e-01 : f32
    %6 = vector.broadcast %cst_5 : f32 to vector<8x128xf32>
    %7 = arith.mulf %6, %5 : vector<8x128xf32>
    %cst_6 = arith.constant 0.707106769 : f32
    %8 = vector.broadcast %cst_6 : f32 to vector<8x128xf32>
    %9 = arith.mulf %5, %8 : vector<8x128xf32>
    %10 = math.erf %9 : vector<8x128xf32>
    %cst_7 = arith.constant 1.000000e+00 : f32
    %11 = vector.broadcast %cst_7 : f32 to vector<8x128xf32>
    %12 = arith.addf %11, %10 : vector<8x128xf32>
    %13 = arith.mulf %7, %12 : vector<8x128xf32>
    %c0_8 = arith.constant 0 : index
    %c0_9 = arith.constant 0 : index
    %14 = vector.load %arg4[%c0_8, %c0_9] : memref<128x128xf32, #tpu.memory_space<vmem>>, vector<128x128xf32>
    %cst_10 = arith.constant dense<0.000000e+00> : vector<8x128xf32>
    %15 = tpu.matmul %13, %14, %cst_10 {dimension_numbers = #tpu.dot_dimension_numbers<[1], [0], [0], [1], [0, 0, 1, 1], [], []>} : vector<8x128xf32>, vector<128x128xf32>, vector<8x128xf32> -> vector<8x128xf32>
    %c0_11 = arith.constant 0 : index
    %c0_12 = arith.constant 0 : index
    %16 = vector.load %arg5[%c0_11, %c0_12] : memref<1x128xf32, #tpu.memory_space<vmem>>, vector<1x128xf32>
    %17 = vector.broadcast %16 : vector<1x128xf32> to vector<8x128xf32>
    %18 = arith.addf %15, %17 : vector<8x128xf32>
    %19 = arith.negf %18 : vector<8x128xf32>
    %20 = math.exp %19 : vector<8x128xf32>
    %cst_13 = arith.constant 1.000000e+00 : f32
    %21 = vector.broadcast %cst_13 : f32 to vector<8x128xf32>
    %22 = arith.addf %21, %20 : vector<8x128xf32>
    %23 = arith.divf %21, %22 : vector<8x128xf32>
    %c0_14 = arith.constant 0 : index
    %c0_15 = arith.constant 0 : index
    %24 = vector.load %arg6[%c0_14, %c0_15] : memref<128x128xf32, #tpu.memory_space<vmem>>, vector<128x128xf32>
    %cst_16 = arith.constant dense<0.000000e+00> : vector<8x128xf32>
    %25 = tpu.matmul %23, %24, %cst_16 {dimension_numbers = #tpu.dot_dimension_numbers<[1], [0], [0], [1], [0, 0, 1, 1], [], []>} : vector<8x128xf32>, vector<128x128xf32>, vector<8x128xf32> -> vector<8x128xf32>
    %c0_17 = arith.constant 0 : index
    %c0_18 = arith.constant 0 : index
    %26 = vector.load %arg7[%c0_17, %c0_18] : memref<1x128xf32, #tpu.memory_space<vmem>>, vector<1x128xf32>
    %27 = vector.broadcast %26 : vector<1x128xf32> to vector<8x128xf32>
    %28 = arith.addf %25, %27 : vector<8x128xf32>
    %cst_19 = arith.constant dense<0xFF800000> : vector<8xf32>
    %29 = vector.multi_reduction <maximumf>, %28, %cst_19 [1] : vector<8x128xf32> to vector<8xf32>
    %30 = vector.shape_cast %29 : vector<8xf32> to vector<8x1xf32>
    %31 = vector.broadcast %30 : vector<8x1xf32> to vector<8x128xf32>
    %32 = arith.subf %28, %31 : vector<8x128xf32>
    %33 = math.exp %32 : vector<8x128xf32>
    %cst_20 = arith.constant dense<0.000000e+00> : vector<8xf32>
    %34 = vector.multi_reduction <add>, %33, %cst_20 [1] : vector<8x128xf32> to vector<8xf32>
    %35 = vector.shape_cast %34 : vector<8xf32> to vector<8x1xf32>
    %36 = vector.broadcast %35 : vector<8x1xf32> to vector<8x128xf32>
    %37 = arith.divf %33, %36 : vector<8x128xf32>
    %38 = vector.extract_strided_slice %37 {offsets = [0, 0], sizes = [8, 16], strides = [1, 1]} : vector<8x128xf32> to vector<8x16xf32>
    %c0_21 = arith.constant 0 : index
    %c0_22 = arith.constant 0 : index
    %39 = vector.load %arg8[%c0_21, %c0_22] : memref<8x16xf32, #tpu.memory_space<vmem>>, vector<8x16xf32>
    tpu.vector_store %arg8[%c0_21, %c0_22], %38 {strides = array<i32>} : memref<8x16xf32, #tpu.memory_space<vmem>>, vector<8x16xf32>,
    return
  }
  func.func @transform_0(%arg0: i32) -> (i32, i32) {
    %c0_i32 = arith.constant 0 : i32
    %c0_i32_0 = arith.constant 0 : i32
    return %arg0, %c0_i32 : i32, i32
  }
  func.func @transform_1(%arg0: i32) -> (i32, i32) {
    %c0_i32 = arith.constant 0 : i32
    %c0_i32_0 = arith.constant 0 : i32
    %c0_i32_1 = arith.constant 0 : i32
    return %c0_i32, %c0_i32_0 : i32, i32
  }
  func.func @transform_2(%arg0: i32) -> (i32, i32) {
    %c0_i32 = arith.constant 0 : i32
    %c0_i32_0 = arith.constant 0 : i32
    %c0_i32_1 = arith.constant 0 : i32
    return %c0_i32, %c0_i32_0 : i32, i32
  }
  func.func @transform_3(%arg0: i32) -> (i32, i32) {
    %c0_i32 = arith.constant 0 : i32
    %c0_i32_0 = arith.constant 0 : i32
    %c0_i32_1 = arith.constant 0 : i32
    return %c0_i32, %c0_i32_0 : i32, i32
  }
  func.func @transform_4(%arg0: i32) -> (i32, i32) {
    %c0_i32 = arith.constant 0 : i32
    %c0_i32_0 = arith.constant 0 : i32
    %c0_i32_1 = arith.constant 0 : i32
    return %c0_i32, %c0_i32_0 : i32, i32
  }
  func.func @transform_5(%arg0: i32) -> (i32, i32) {
    %c0_i32 = arith.constant 0 : i32
    %c0_i32_0 = arith.constant 0 : i32
    %c0_i32_1 = arith.constant 0 : i32
    return %c0_i32, %c0_i32_0 : i32, i32
  }
  func.func @transform_6(%arg0: i32) -> (i32, i32) {
    %c0_i32 = arith.constant 0 : i32
    %c0_i32_0 = arith.constant 0 : i32
    %c0_i32_1 = arith.constant 0 : i32
    return %c0_i32, %c0_i32_0 : i32, i32
  }
  func.func @transform_7(%arg0: i32) -> (i32, i32) {
    %c0_i32 = arith.constant 0 : i32
    %c0_i32_0 = arith.constant 0 : i32
    return %arg0, %c0_i32 : i32, i32
  }
}

</mosaic_0001>

<llo_original>
// kernel: tpu_custom_call.1
$region0: #{tpu_custom_call.1}
  #allocation0 [shape = 'u32[]', space=smem, size = 0x4, offset = 0x4, fixed_abs, tag = 'smem constant byte address 0x4 - core index']
  #allocation1 [shape = 'u32[144,128]{1,0:T(1,128)}', space=vmem, size = 0x12000, scoped, tag = 'internal scratch']
  %s0 = inlined_call_operand.hbm [shape: f32[8,32], index: 0, kind: input, shape index: {}]
  %s1 = inlined_call_operand.hbm [shape: f32[32,128], index: 1, kind: input, shape index: {}]
  %s2 = inlined_call_operand.vmem [shape: f32[1,128], index: 2, kind: input, shape index: {}]
  %s3 = inlined_call_operand.hbm [shape: f32[128,128], index: 3, kind: input, shape index: {}]
  %s4 = inlined_call_operand.vmem [shape: f32[1,128], index: 4, kind: input, shape index: {}]
  %s5 = inlined_call_operand.hbm [shape: f32[128,128], index: 5, kind: input, shape index: {}]
  %s6 = inlined_call_operand.vmem [shape: f32[1,128], index: 6, kind: input, shape index: {}]
  %s7 = inlined_call_operand.hbm [shape: f32[8,16], index: 7, kind: output, shape index: {}]
  %s8 = sld [smem:[#allocation0]]
  $region54: #{tpu_custom_call.1} parent=0
    _
  %s10 = ssub.s32 1, %s8
  %s11 = scalar_select 0, %s10, %s8
  $region1: #{tpu_custom_call.1} parent=0
    #allocation2 [shape = 'u8[4096]{0}', space=vmem, size = 0x1000, scoped, tag = 'input window, operand 0, single buffered']
    #allocation3 [shape = 's32[1]{0}', space=sflag, size = 0x4, scoped, tag = 'scoped memory for tpu_custom_call.1']
    #allocation4 [shape = 's32[1]{0}', space=sflag, size = 0x4, scoped, tag = 'scoped memory for tpu_custom_call.1']
    #allocation5 [shape = 'u8[16384]{0}', space=vmem, size = 0x4000, scoped, tag = 'input window, operand 1, single buffered']
    #allocation6 [shape = 's32[1]{0}', space=sflag, size = 0x4, scoped, tag = 'scoped memory for tpu_custom_call.1']
    #allocation7 [shape = 'u8[65536]{0}', space=vmem, size = 0x10000, scoped, tag = 'input window, operand 3, single buffered']
    #allocation8 [shape = 'u8[65536]{0}', space=vmem, size = 0x10000, scoped, tag = 'input window, operand 5, single buffered']
    #allocation9 [shape = 's32[1]{0}', space=sflag, size = 0x4, scoped, tag = 'scoped memory for tpu_custom_call.1']
    #allocation10 [shape = 'u8[4096]{0}', space=vmem, size = 0x1000, scoped, tag = 'output window, operand 0, single buffered']
    %12 = vsyncpa [#allocation3], 0
    %13 = vsyncpa [#allocation6], 0
    %14 = vsyncpa [#allocation9], 0
    %15 = vsyncpa [#allocation4], 0
    // Predicated region
    $region2: #{tpu_custom_call.1} parent=1 // pred_check
      _
    $region3: #{tpu_custom_call.1} parent=1 // pred_check_branch
      %17 = sbr.rel (0) target = $region5
    $region4: #{tpu_custom_call.1} parent=1 // pred_region
      %s19 = ssub.s32 128, 128
      %20 = vsyncadd [#allocation3], %s19
      %s22 = sshll.u32 [#allocation2], 4
      %s23 = int_to_ptr.vmem [resolvable:$true] %s22
      %25 = dma.hbm_to_vmem [thread:$0]  %s0, 128, %s23, [#allocation3]
    $region5: #{tpu_custom_call.1} parent=1 // pred_fallthru
      _
    // Predicated region
    $region6: #{tpu_custom_call.1} parent=1 // pred_check
      _
    $region7: #{tpu_custom_call.1} parent=1 // pred_check_branch
      %27 = sbr.rel (0) target = $region9
    $region8: #{tpu_custom_call.1} parent=1 // pred_region
      %s29 = ssub.s32 512, 512
      %30 = vsyncadd [#allocation6], %s29
      %s31 = sshll.u32 [#allocation5], 4
      %s32 = int_to_ptr.vmem [resolvable:$true] %s31
      %37 = dma.hbm_to_vmem [thread:$0]  %s1, 512, %s32, [#allocation6], 128, 128, 8
    $region9: #{tpu_custom_call.1} parent=1 // pred_fallthru
      _
    // Predicated region
    $region10: #{tpu_custom_call.1} parent=1 // pred_check
      _
    $region11: #{tpu_custom_call.1} parent=1 // pred_check_branch
      %39 = sbr.rel (0) target = $region13
    $region12: #{tpu_custom_call.1} parent=1 // pred_region
      _
    $region13: #{tpu_custom_call.1} parent=1 // pred_fallthru
      _
    // Predicated region
    $region14: #{tpu_custom_call.1} parent=1 // pred_check
      _
    $region15: #{tpu_custom_call.1} parent=1 // pred_check_branch
      %41 = sbr.rel (0) target = $region17
    $region16: #{tpu_custom_call.1} parent=1 // pred_region
      %s43 = ssub.s32 2048, 2048
      %44 = vsyncadd [#allocation6], %s43
      %s45 = sshll.u32 [#allocation7], 4
      %s46 = int_to_ptr.vmem [resolvable:$true] %s45
      %51 = dma.hbm_to_vmem [thread:$0]  %s3, 2048, %s46, [#allocation6], 128, 128, 8
    $region17: #{tpu_custom_call.1} parent=1 // pred_fallthru
      _
    // Predicated region
    $region18: #{tpu_custom_call.1} parent=1 // pred_check
      _
    $region19: #{tpu_custom_call.1} parent=1 // pred_check_branch
      %53 = sbr.rel (0) target = $region21
    $region20: #{tpu_custom_call.1} parent=1 // pred_region
      _
    $region21: #{tpu_custom_call.1} parent=1 // pred_fallthru
      _
    // Predicated region
    $region22: #{tpu_custom_call.1} parent=1 // pred_check
      _
    $region23: #{tpu_custom_call.1} parent=1 // pred_check_branch
      %55 = sbr.rel (0) target = $region25
    $region24: #{tpu_custom_call.1} parent=1 // pred_region
      %s57 = ssub.s32 2048, 2048
      %58 = vsyncadd [#allocation9], %s57
      %s59 = sshll.u32 [#allocation8], 4
      %s60 = int_to_ptr.vmem [resolvable:$true] %s59
      %65 = dma.hbm_to_vmem [thread:$0]  %s5, 2048, %s60, [#allocation9], 128, 128, 8
    $region25: #{tpu_custom_call.1} parent=1 // pred_fallthru
      _
    // Predicated region
    $region26: #{tpu_custom_call.1} parent=1 // pred_check
      _
    $region27: #{tpu_custom_call.1} parent=1 // pred_check_branch
      %67 = sbr.rel (0) target = $region29
    $region28: #{tpu_custom_call.1} parent=1 // pred_region
      _
    $region29: #{tpu_custom_call.1} parent=1 // pred_fallthru
      _
    // Predicated region
    $region30: #{tpu_custom_call.1} parent=1 // pred_check
      _
    $region31: #{tpu_custom_call.1} parent=1 // pred_check_branch
      %69 = sbr.rel (0) target = $region33
    $region32: #{tpu_custom_call.1} parent=1 // pred_region
      %70 = dma.done [#allocation3], 128
    $region33: #{tpu_custom_call.1} parent=1 // pred_fallthru
      _
    // Predicated region
    $region34: #{tpu_custom_call.1} parent=1 // pred_check
      _
    $region35: #{tpu_custom_call.1} parent=1 // pred_check_branch
      %72 = sbr.rel (0) target = $region37
    $region36: #{tpu_custom_call.1} parent=1 // pred_region
      %73 = dma.done [#allocation6], 512
    $region37: #{tpu_custom_call.1} parent=1 // pred_fallthru
      _
    // Predicated region
    $region38: #{tpu_custom_call.1} parent=1 // pred_check
      _
    $region39: #{tpu_custom_call.1} parent=1 // pred_check_branch
      %75 = sbr.rel (0) target = $region41
    $region40: #{tpu_custom_call.1} parent=1 // pred_region
      %76 = dma.done [#allocation6], 2048
    $region41: #{tpu_custom_call.1} parent=1 // pred_fallthru
      _
    // Predicated region
    $region42: #{tpu_custom_call.1} parent=1 // pred_check
      _
    $region43: #{tpu_custom_call.1} parent=1 // pred_check_branch
      %78 = sbr.rel (0) target = $region45
    $region44: #{tpu_custom_call.1} parent=1 // pred_region
      %79 = dma.done [#allocation9], 2048
    $region45: #{tpu_custom_call.1} parent=1 // pred_fallthru
      _
    %v80 = vld [vmem:[#allocation2] sm:$0xff]
    %v81 = vld [vmem:[#allocation5] sm:$0xff]
    %v82 = vld [vmem:[#allocation5 + $0x8] sm:$0xff]
    %v83 = vld [vmem:[#allocation5 + $0x10] sm:$0xff]
    %v84 = vld [vmem:[#allocation5 + $0x18] sm:$0xff]
    %v85 = vld [vmem:[%s2] sm:$0x1]
    %v87 = vlaneseq
    %v88 = vshrl.u32 %v87, 7
    %v89 = vsub.s32 0, %v88
    %v90 = vrot.slane %v85, %v89
    %vm92 = vcmask 261120
    %v94 = vsel %vm92, %v80, 0
    %96 = vmatprep.subr.mxu0 0.0
    %97 = vmatpush1.msra.mxu0 %v81
    %98 = vmatprep.subr.mxu0 0.0
    %99 = vmatpush1.msra.mxu0 %v82
    %100 = vmatprep.subr.mxu0 0.0
    %101 = vmatpush1.msra.mxu0 %v83
    %102 = vmatprep.subr.mxu0 0.0
    %103 = vmatpush1.msra.mxu0 %v84
    %104 = vmatprep.subr.mxu0 0.0
    %105 = vmatpush1.msra.mxu0 0.0
    %106 = vmatprep.subr.mxu0 0.0
    %107 = vmatpush1.msra.mxu0 0.0
    %108 = vmatprep.subr.mxu0 0.0
    %109 = vmatpush1.msra.mxu0 0.0
    %110 = vmatprep.subr.mxu0 0.0
    %111 = vmatpush1.msra.mxu0 0.0
    %112 = vmatprep.subr.mxu0 0.0
    %113 = vmatpush1.msra.mxu0 0.0
    %114 = vmatprep.subr.mxu0 0.0
    %115 = vmatpush1.msra.mxu0 0.0
    %116 = vmatprep.subr.mxu0 0.0
    %117 = vmatpush1.msra.mxu0 0.0
    %118 = vmatprep.subr.mxu0 0.0
    %119 = vmatpush1.msra.mxu0 0.0
    %120 = vmatprep.subr.mxu0 0.0
    %121 = vmatpush1.msra.mxu0 0.0
    %122 = vmatprep.subr.mxu0 0.0
    %123 = vmatpush1.msra.mxu0 0.0
    %124 = vmatprep.subr.mxu0 0.0
    %125 = vmatpush1.msra.mxu0 0.0
    %126 = vmatprep.subr.mxu0 0.0
    %127 = vmatpush1.msra.mxu0 0.0
    %128 = vmatprep.subr.mxu0 0.0
    %129 = vmatpush1.msra.mxu0 0.0
    %130 = vmatprep.subr.mxu0 0.0
    %131 = vmatpush1.msra.mxu0 0.0
    %132 = vmatprep.subr.mxu0 0.0
    %133 = vmatpush1.msra.mxu0 0.0
    %134 = vmatprep.subr.mxu0 0.0
    %135 = vmatpush1.msra.mxu0 0.0
    %136 = vmatprep.subr.mxu0 0.0
    %137 = vmatpush1.msra.mxu0 0.0
    %138 = vmatprep.subr.mxu0 0.0
    %139 = vmatpush1.msra.mxu0 0.0
    %140 = vmatprep.subr.mxu0 0.0
    %141 = vmatpush1.msra.mxu0 0.0
    %142 = vmatprep.subr.mxu0 0.0
    %143 = vmatpush1.msra.mxu0 0.0
    %144 = vmatprep.subr.mxu0 0.0
    %145 = vmatpush1.msra.mxu0 0.0
    %146 = vmatprep.subr.mxu0 0.0
    %147 = vmatpush1.msra.mxu0 0.0
    %148 = vmatprep.subr.mxu0 0.0
    %149 = vmatpush1.msra.mxu0 0.0
    %150 = vmatprep.subr.mxu0 0.0
    %151 = vmatpush1.msra.mxu0 0.0
    %152 = vmatprep.subr.mxu0 0.0
    %153 = vmatpush1.msra.mxu0 0.0
    %154 = vmatprep.subr.mxu0 0.0
    %155 = vmatpush1.msra.mxu0 0.0
    %156 = vmatprep.subr.mxu0 0.0
    %157 = vmatpush1.msra.mxu0 0.0
    %158 = vmatprep.subr.mxu0 0.0
    %159 = vmatpush1.msra.mxu0 0.0
    %160 = vmatprep.mubr.f32.mxu0 0.0
    %161 = vmatmul.mubr.f32.gmra.mrb[0].mxu0 %v94
    %v162 = vpop.f32.mrb[0].mxu0
    %v163 = vadd.f32 %v90, %v162
    %v164 = vpop.f32.mrb[0].mxu0
    %165 = vdwg.mxu0
    %v166 = vmul.f32 %v163, 0.5
    %v167 = vmul.f32 %v163, 0.70710677
    %v168 = verf.f32.pop %v167
    %v169 = vadd.f32 %v168, 1.0
    %v170 = vmul.f32 %v166, %v169
    %v171 = vld [vmem:[#allocation7] sm:$0xff]
    %v172 = vld [vmem:[#allocation7 + $0x8] sm:$0xff]
    %v173 = vld [vmem:[#allocation7 + $0x10] sm:$0xff]
    %v174 = vld [vmem:[#allocation7 + $0x18] sm:$0xff]
    %v175 = vld [vmem:[#allocation7 + $0x20] sm:$0xff]
    %v176 = vld [vmem:[#allocation7 + $0x28] sm:$0xff]
    %v177 = vld [vmem:[#allocation7 + $0x30] sm:$0xff]
    %v178 = vld [vmem:[#allocation7 + $0x38] sm:$0xff]
    %v179 = vld [vmem:[#allocation7 + $0x40] sm:$0xff]
    %v180 = vld [vmem:[#allocation7 + $0x48] sm:$0xff]
    %v181 = vld [vmem:[#allocation7 + $0x50] sm:$0xff]
    %v182 = vld [vmem:[#allocation7 + $0x58] sm:$0xff]
    %v183 = vld [vmem:[#allocation7 + $0x60] sm:$0xff]
    %v184 = vld [vmem:[#allocation7 + $0x68] sm:$0xff]
    %v185 = vld [vmem:[#allocation7 + $0x70] sm:$0xff]
    %v186 = vld [vmem:[#allocation7 + $0x78] sm:$0xff]
    %v187 = vld [vmem:[%s4] sm:$0x1]
    %v189 = vlaneseq
    %v190 = vshrl.u32 %v189, 7
    %v191 = vsub.s32 0, %v190
    %v192 = vrot.slane %v187, %v191
    %194 = vmatprep.subr.mxu0 0.0
    %195 = vmatpush1.msra.mxu0 %v171
    %196 = vmatprep.subr.mxu0 0.0
    %197 = vmatpush1.msra.mxu0 %v172
    %198 = vmatprep.subr.mxu0 0.0
    %199 = vmatpush1.msra.mxu0 %v173
    %200 = vmatprep.subr.mxu0 0.0
    %201 = vmatpush1.msra.mxu0 %v174
    %202 = vmatprep.subr.mxu0 0.0
    %203 = vmatpush1.msra.mxu0 %v175
    %204 = vmatprep.subr.mxu0 0.0
    %205 = vmatpush1.msra.mxu0 %v176
    %206 = vmatprep.subr.mxu0 0.0
    %207 = vmatpush1.msra.mxu0 %v177
    %208 = vmatprep.subr.mxu0 0.0
    %209 = vmatpush1.msra.mxu0 %v178
    %210 = vmatprep.subr.mxu0 0.0
    %211 = vmatpush1.msra.mxu0 %v179
    %212 = vmatprep.subr.mxu0 0.0
    %213 = vmatpush1.msra.mxu0 %v180
    %214 = vmatprep.subr.mxu0 0.0
    %215 = vmatpush1.msra.mxu0 %v181
    %216 = vmatprep.subr.mxu0 0.0
    %217 = vmatpush1.msra.mxu0 %v182
    %218 = vmatprep.subr.mxu0 0.0
    %219 = vmatpush1.msra.mxu0 %v183
    %220 = vmatprep.subr.mxu0 0.0
    %221 = vmatpush1.msra.mxu0 %v184
    %222 = vmatprep.subr.mxu0 0.0
    %223 = vmatpush1.msra.mxu0 %v185
    %224 = vmatprep.subr.mxu0 0.0
    %225 = vmatpush1.msra.mxu0 %v186
    %226 = vmatprep.subr.mxu0 0.0
    %227 = vmatpush1.msra.mxu0 0.0
    %228 = vmatprep.subr.mxu0 0.0
    %229 = vmatpush1.msra.mxu0 0.0
    %230 = vmatprep.subr.mxu0 0.0
    %231 = vmatpush1.msra.mxu0 0.0
    %232 = vmatprep.subr.mxu0 0.0
    %233 = vmatpush1.msra.mxu0 0.0
    %234 = vmatprep.subr.mxu0 0.0
    %235 = vmatpush1.msra.mxu0 0.0
    %236 = vmatprep.subr.mxu0 0.0
    %237 = vmatpush1.msra.mxu0 0.0
    %238 = vmatprep.subr.mxu0 0.0
    %239 = vmatpush1.msra.mxu0 0.0
    %240 = vmatprep.subr.mxu0 0.0
    %241 = vmatpush1.msra.mxu0 0.0
    %242 = vmatprep.subr.mxu0 0.0
    %243 = vmatpush1.msra.mxu0 0.0
    %244 = vmatprep.subr.mxu0 0.0
    %245 = vmatpush1.msra.mxu0 0.0
    %246 = vmatprep.subr.mxu0 0.0
    %247 = vmatpush1.msra.mxu0 0.0
    %248 = vmatprep.subr.mxu0 0.0
    %249 = vmatpush1.msra.mxu0 0.0
    %250 = vmatprep.subr.mxu0 0.0
    %251 = vmatpush1.msra.mxu0 0.0
    %252 = vmatprep.subr.mxu0 0.0
    %253 = vmatpush1.msra.mxu0 0.0
    %254 = vmatprep.subr.mxu0 0.0
    %255 = vmatpush1.msra.mxu0 0.0
    %256 = vmatprep.subr.mxu0 0.0
    %257 = vmatpush1.msra.mxu0 0.0
    %258 = vmatprep.mubr.f32.mxu0 0.0
    %259 = vmatmul.mubr.f32.gmra.mrb[0].mxu0 %v170
    %v260 = vpop.f32.mrb[0].mxu0
    %v261 = vadd.f32 %v192, %v260
    %v262 = vpop.f32.mrb[0].mxu0
    %263 = vdwg.mxu0
    %v264 = vxor.u32 %v261, 2147483648
    %v265 = vmul.f32 %v264, 1.442695
    %v266 = vpow.pop %v265
    %v267 = vadd.f32 %v266, 1.0
    %v268 = vrcp.pop %v267
    %v269 = vmul.f32 1.0, %v268
    %v270 = vld [vmem:[#allocation8] sm:$0xff]
    %v271 = vld [vmem:[#allocation8 + $0x8] sm:$0xff]
    %v272 = vld [vmem:[#allocation8 + $0x10] sm:$0xff]
    %v273 = vld [vmem:[#allocation8 + $0x18] sm:$0xff]
    %v274 = vld [vmem:[#allocation8 + $0x20] sm:$0xff]
    %v275 = vld [vmem:[#allocation8 + $0x28] sm:$0xff]
    %v276 = vld [vmem:[#allocation8 + $0x30] sm:$0xff]
    %v277 = vld [vmem:[#allocation8 + $0x38] sm:$0xff]
    %v278 = vld [vmem:[#allocation8 + $0x40] sm:$0xff]
    %v279 = vld [vmem:[#allocation8 + $0x48] sm:$0xff]
    %v280 = vld [vmem:[#allocation8 + $0x50] sm:$0xff]
    %v281 = vld [vmem:[#allocation8 + $0x58] sm:$0xff]
    %v282 = vld [vmem:[#allocation8 + $0x60] sm:$0xff]
    %v283 = vld [vmem:[#allocation8 + $0x68] sm:$0xff]
    %v284 = vld [vmem:[#allocation8 + $0x70] sm:$0xff]
    %v285 = vld [vmem:[#allocation8 + $0x78] sm:$0xff]
    %v286 = vld [vmem:[%s6] sm:$0x1]
    %v288 = vlaneseq
    %v289 = vshrl.u32 %v288, 7
    %v290 = vsub.s32 0, %v289
    %v291 = vrot.slane %v286, %v290
    %293 = vmatprep.subr.mxu0 0.0
    %294 = vmatpush1.msra.mxu0 %v270
    %295 = vmatprep.subr.mxu0 0.0
    %296 = vmatpush1.msra.mxu0 %v271
    %297 = vmatprep.subr.mxu0 0.0
    %298 = vmatpush1.msra.mxu0 %v272
    %299 = vmatprep.subr.mxu0 0.0
    %300 = vmatpush1.msra.mxu0 %v273
    %301 = vmatprep.subr.mxu0 0.0
    %302 = vmatpush1.msra.mxu0 %v274
    %303 = vmatprep.subr.mxu0 0.0
    %304 = vmatpush1.msra.mxu0 %v275
    %305 = vmatprep.subr.mxu0 0.0
    %306 = vmatpush1.msra.mxu0 %v276
    %307 = vmatprep.subr.mxu0 0.0
    %308 = vmatpush1.msra.mxu0 %v277
    %309 = vmatprep.subr.mxu0 0.0
    %310 = vmatpush1.msra.mxu0 %v278
    %311 = vmatprep.subr.mxu0 0.0
    %312 = vmatpush1.msra.mxu0 %v279
    %313 = vmatprep.subr.mxu0 0.0
    %314 = vmatpush1.msra.mxu0 %v280
    %315 = vmatprep.subr.mxu0 0.0
    %316 = vmatpush1.msra.mxu0 %v281
    %317 = vmatprep.subr.mxu0 0.0
    %318 = vmatpush1.msra.mxu0 %v282
    %319 = vmatprep.subr.mxu0 0.0
    %320 = vmatpush1.msra.mxu0 %v283
    %321 = vmatprep.subr.mxu0 0.0
    %322 = vmatpush1.msra.mxu0 %v284
    %323 = vmatprep.subr.mxu0 0.0
    %324 = vmatpush1.msra.mxu0 %v285
    %325 = vmatprep.subr.mxu0 0.0
    %326 = vmatpush1.msra.mxu0 0.0
    %327 = vmatprep.subr.mxu0 0.0
    %328 = vmatpush1.msra.mxu0 0.0
    %329 = vmatprep.subr.mxu0 0.0
    %330 = vmatpush1.msra.mxu0 0.0
    %331 = vmatprep.subr.mxu0 0.0
    %332 = vmatpush1.msra.mxu0 0.0
    %333 = vmatprep.subr.mxu0 0.0
    %334 = vmatpush1.msra.mxu0 0.0
    %335 = vmatprep.subr.mxu0 0.0
    %336 = vmatpush1.msra.mxu0 0.0
    %337 = vmatprep.subr.mxu0 0.0
    %338 = vmatpush1.msra.mxu0 0.0
    %339 = vmatprep.subr.mxu0 0.0
    %340 = vmatpush1.msra.mxu0 0.0
    %341 = vmatprep.subr.mxu0 0.0
    %342 = vmatpush1.msra.mxu0 0.0
    %343 = vmatprep.subr.mxu0 0.0
    %344 = vmatpush1.msra.mxu0 0.0
    %345 = vmatprep.subr.mxu0 0.0
    %346 = vmatpush1.msra.mxu0 0.0
    %347 = vmatprep.subr.mxu0 0.0
    %348 = vmatpush1.msra.mxu0 0.0
    %349 = vmatprep.subr.mxu0 0.0
    %350 = vmatpush1.msra.mxu0 0.0
    %351 = vmatprep.subr.mxu0 0.0
    %352 = vmatpush1.msra.mxu0 0.0
    %353 = vmatprep.subr.mxu0 0.0
    %354 = vmatpush1.msra.mxu0 0.0
    %355 = vmatprep.subr.mxu0 0.0
    %356 = vmatpush1.msra.mxu0 0.0
    %357 = vmatprep.mubr.f32.mxu0 0.0
    %358 = vmatmul.mubr.f32.gmra.mrb[0].mxu0 %v269
    %v359 = vpop.f32.mrb[0].mxu0
    %v360 = vadd.f32 %v291, %v359
    %v361 = vpop.f32.mrb[0].mxu0
    %362 = vdwg.mxu0
    %363 = vmax.xlane.f32.xlu0 %v360
    %v364 = vpop.xlane.xlu0 %363
    %v365 = vsub.f32 %v360, %v364
    %v366 = vmul.f32 %v365, 1.442695
    %v367 = vpow.pop %v366
    %368 = vadd.xlane.f32.xlu0 %v367
    %v369 = vpop.xlane.xlu0 %368
    %v370 = vrcp.pop %v369
    %v371 = vmul.f32 %v367, %v370
    %vm372 = vcmask 130048
    %373 = vst.msk [vmem:[#allocation10] sm:$0xff] %vm372, %v371
    // Predicated region
    $region46: #{tpu_custom_call.1} parent=1 // pred_check
      _
    $region47: #{tpu_custom_call.1} parent=1 // pred_check_branch
      %375 = sbr.rel (0) target = $region49
    $region48: #{tpu_custom_call.1} parent=1 // pred_region
      %s377 = ssub.s32 128, 128
      %378 = vsyncadd [#allocation4], %s377
      %s380 = sshll.u32 [#allocation10], 4
      %s381 = int_to_ptr.vmem [resolvable:$true] %s380
      %383 = dma.vmem_to_hbm [thread:$0]  %s381, 128, %s7, [#allocation4]
    $region49: #{tpu_custom_call.1} parent=1 // pred_fallthru
      _
    // Predicated region
    $region50: #{tpu_custom_call.1} parent=1 // pred_check
      _
    $region51: #{tpu_custom_call.1} parent=1 // pred_check_branch
      %385 = sbr.rel (0) target = $region53
    $region52: #{tpu_custom_call.1} parent=1 // pred_region
      %386 = dma.done [#allocation4], 128
    $region53: #{tpu_custom_call.1} parent=1 // pred_fallthru
      _
    %387 = vsyncpa [#allocation3], 1
    %388 = vsyncpa [#allocation6], 1
    %389 = vsyncpa [#allocation9], 1
    %390 = vsyncpa [#allocation4], 1

</llo_original>
